<compile_context>
chip_gen: v6e
topology: v6e:2x2x1
jax: 0.10.0
libtpu: 0.0.40
codegen_flags: <defaults>
</compile_context>

<pallas_src>
import functools
import math

import jax
import jax.numpy as jnp
from jax import lax
from jax.experimental import pallas as pl
from jax.experimental.pallas import tpu as pltpu


def _interface_kernel(x_ref, w_ref, b_ref, s_ref, o_ref, *,
                      sig_start, sig_end, modes_start, modes_end):
    """Fused DNC interface layer (one batch tile).

    x_ref: [TB, F]   controller hidden state (bf16)
    w_ref: [F, Tp]   fused weights for all 10 heads, zero-padded (bf16)
    b_ref: [1, Tp]   fused bias, zero-padded (f32)
    s_ref: [Tp, Tp]  read-mode same-group matrix (bf16 0/1), precomputed
    o_ref: [TB, Tp]  flat interface vector with activations applied
    """
    Tp = o_ref.shape[-1]

    # Single fused MXU matmul for all interface heads (bf16 in, f32 acc).
    y = jnp.dot(x_ref[...], w_ref[...],
                preferred_element_type=jnp.float32) + b_ref[...]

    col = lax.broadcasted_iota(jnp.int32, (1, Tp), 1)
    sig_mask = (col >= sig_start) & (col < sig_end)
    modes_mask = (col >= modes_start) & (col < modes_end)

    # Row max over the whole read-modes block (one XLU reduce).  Subtracting a
    # single per-row constant keeps the per-group softmax mathematically exact;
    # the -80 clamp only matters for groups whose logits all sit >80 below the
    # block max (pathological for this layer's pre-activations).
    m_blk = jnp.max(jnp.where(modes_mask, y, -jnp.inf), axis=-1, keepdims=True)
    z = jnp.maximum(y - m_blk, -80.0)

    # One shared exp for both the sigmoid and softmax lanes (single EUP slot).
    arg = jnp.where(sig_mask, -y, jnp.where(modes_mask, z, 0.0))
    ex = jnp.exp(arg)

    # Sigmoid lanes: 1 / (1 + exp(-y))  (full-precision reciprocal).
    sig_val = 1.0 / (1.0 + ex)

    # Softmax lanes: per-group denominators via ONE lane-dense bf16 MXU matmul
    # against the precomputed same-group matrix S.
    e = jnp.where(modes_mask, ex, 0.0)                       # f32 numerator
    denom = jnp.dot(e.astype(jnp.bfloat16), s_ref[...],
                    preferred_element_type=jnp.float32)
    denom = denom + jnp.where(modes_mask, 0.0, 1.0)          # keep lanes finite
    p = e * pl.reciprocal(denom, approx=True)

    # Single lane-dense, unmasked store of the whole padded interface vector.
    out = jnp.where(modes_mask, p, jnp.where(sig_mask, sig_val, y))
    o_ref[...] = out.astype(o_ref.dtype)


class DNCInterfacePallas:
    """JAX/Pallas re-implementation of DNC_InterfaceLayer."""

    def __init__(self, input_size, num_writes, num_reads, word_size, key,
                 out_dtype=jnp.float32, batch_tile=512):
        self.F = input_size
        self.Wn = num_writes
        self.R = num_reads
        self.D = word_size
        self.M = 1 + 2 * num_writes  # num_read_modes
        self.out_dtype = out_dtype
        self._tb = batch_tile

        # (name, flat_width, output_view, activation)
        self.segments = [
            ("read_keys",       self.R * self.D,  (self.R, self.D),  "none"),
            ("read_strengths",  self.R,           (self.R,),         "none"),
            ("write_keys",      self.Wn * self.D, (self.Wn, self.D), "none"),
            ("write_strengths", self.Wn,          (self.Wn,),        "none"),
            ("erase_vectors",   self.Wn * self.D, (self.Wn, self.D), "sigmoid"),
            ("write_vectors",   self.Wn * self.D, (self.Wn, self.D), "sigmoid"),
            ("free_gate",       self.R,           (self.R,),         "sigmoid"),
            ("allocation_gate", self.Wn,          (self.Wn,),        "sigmoid"),
            ("write_gate",      self.Wn,          (self.Wn,),        "sigmoid"),
            ("read_modes",      self.R * self.M,  (self.R, self.M),  "softmax"),
        ]
        self.T = sum(s[1] for s in self.segments)
        self.Tp = ((self.T + 127) // 128) * 128   # lane-dense padded width

        # Segment offsets (into the unpadded prefix of the padded vector).
        self.offsets = {}
        off = 0
        for (name, width, _, _) in self.segments:
            self.offsets[name] = off
            off += width
        self.sig_start = self.offsets["erase_vectors"]
        self.sig_end = self.offsets["write_gate"] + self.Wn
        self.modes_start = self.offsets["read_modes"]
        self.modes_end = self.modes_start + self.R * self.M
        assert self.sig_end == self.modes_start  # sigmoid block is contiguous

        # Deterministic per-layer init matching nn.Linear: U(-1/sqrt(F), 1/sqrt(F)).
        bound = 1.0 / math.sqrt(self.F)
        w_parts, b_parts = [], []
        for (_, width, _, _) in self.segments:
            key, kw, kb = jax.random.split(key, 3)
            w_parts.append(jax.random.uniform(
                kw, (self.F, width), jnp.float32, -bound, bound))
            b_parts.append(jax.random.uniform(
                kb, (width,), jnp.float32, -bound, bound))
        w = jnp.concatenate(w_parts, axis=1)               # [F, T]
        b = jnp.concatenate(b_parts)                       # [T]
        pad = self.Tp - self.T
        w = jnp.pad(w, ((0, 0), (0, pad)))
        b = jnp.pad(b, (0, pad))
        # bf16 weights: halves weight DMA bytes, native MXU path (f32 acc).
        self.w = w.astype(jnp.bfloat16)                    # [F, Tp]
        self.b = b[None, :].astype(jnp.float32)            # [1, Tp]

        # Precomputed same-group matrix for the segmented read_modes softmax:
        # S[i, j] = 1 iff columns i and j belong to the same read-mode group.
        cols = jnp.arange(self.Tp)
        in_modes = (cols >= self.modes_start) & (cols < self.modes_end)
        group = jnp.where(in_modes, (cols - self.modes_start) // self.M, -1)
        same = ((group[:, None] == group[None, :])
                & in_modes[:, None] & in_modes[None, :])
        self.S = same.astype(jnp.bfloat16)                 # [Tp, Tp] 0/1

        self._fwd = jax.jit(self._forward)

    def _forward(self, x):
        B = x.shape[0]
        if x.dtype != jnp.bfloat16:
            # Halves x DMA bytes; the MXU operand is bf16 anyway.
            x = x.astype(jnp.bfloat16)

        TB = B if B <= self._tb else self._tb
        Bp = ((B + TB - 1) // TB) * TB
        if Bp != B:
            x = jnp.pad(x, ((0, Bp - B), (0, 0)))

        kernel = functools.partial(
            _interface_kernel,
            sig_start=self.sig_start, sig_end=self.sig_end,
            modes_start=self.modes_start, modes_end=self.modes_end)

        out_bytes = jnp.dtype(self.out_dtype).itemsize
        cost = pl.CostEstimate(
            flops=2 * Bp * self.F * self.Tp + 2 * Bp * self.Tp * self.Tp,
            transcendentals=Bp * self.Tp,
            bytes_accessed=(2 * Bp * self.F + 2 * self.F * self.Tp
                            + 4 * self.Tp + 2 * self.Tp * self.Tp
                            + out_bytes * Bp * self.Tp),
        )

        flat = pl.pallas_call(
            kernel,
            out_shape=jax.ShapeDtypeStruct((Bp, self.Tp), self.out_dtype),
            grid=(Bp // TB,),
            in_specs=[
                pl.BlockSpec((TB, self.F), lambda i: (i, 0)),        # x tile
                pl.BlockSpec((self.F, self.Tp), lambda i: (0, 0)),   # w resident
                pl.BlockSpec((1, self.Tp), lambda i: (0, 0)),        # b resident
                pl.BlockSpec((self.Tp, self.Tp), lambda i: (0, 0)),  # S resident
            ],
            out_specs=pl.BlockSpec((TB, self.Tp), lambda i: (i, 0)),
            compiler_params=pltpu.CompilerParams(
                dimension_semantics=("parallel",)),
            cost_estimate=cost,
        )(x, self.w, self.b, self.S)

        if Bp != B:
            flat = flat[:B]

        # Glue: slice the flat (padded) interface vector into named views.
        out = {}
        for (name, width, view, _) in self.segments:
            off = self.offsets[name]
            out[name] = flat[:, off:off + width].reshape((B,) + view)
        return out

    def __call__(self, x):
        return self._fwd(x)

    # Pure-JAX reference (same math; same bf16 matmul precision) for checking.
    def reference(self, x):
        B = x.shape[0]
        y = jnp.dot(x.astype(jnp.bfloat16), self.w,
                    preferred_element_type=jnp.float32) + self.b
        out = {}
        for (name, width, view, act) in self.segments:
            off = self.offsets[name]
            seg = y[:, off:off + width].reshape((B,) + view)
            if act == "sigmoid":
                seg = jax.nn.sigmoid(seg)
            elif act == "softmax":
                seg = jax.nn.softmax(seg, axis=2)
            out[name] = seg.astype(self.out_dtype)
        return out


if __name__ == "__main__":
    key = jax.random.PRNGKey(0)
    k_param, k_x = jax.random.split(key)

    B, F = 8, 32          # batch, controller hidden size
    num_writes, num_reads, word_size = 2, 4, 16

    layer = DNCInterfacePallas(F, num_writes, num_reads, word_size, k_param)
    x = jax.random.normal(k_x, (B, F), jnp.float32)

    out = layer(x)
    out = jax.tree_util.tree_map(jax.block_until_ready, out)

    ref = layer.reference(x)
    for name in ref:
        assert out[name].shape == ref[name].shape, name
        assert jnp.allclose(out[name], ref[name], atol=5e-3, rtol=5e-3), name

    print("KERNEL_OK")
</pallas_src>

<mosaic_0001>
module attributes {stable_mosaic.version = 11 : i64} {
  func.func @_interface_kernel(%arg0: i32, %arg1: memref<8x32xbf16, #tpu.memory_space<vmem>>, %arg2: memref<32x256xbf16, #tpu.memory_space<vmem>>, %arg3: memref<1x256xf32, #tpu.memory_space<vmem>>, %arg4: memref<256x256xbf16, #tpu.memory_space<vmem>>, %arg5: memref<8x256xf32, #tpu.memory_space<vmem>>) attributes {dimension_semantics = [#tpu.dimension_semantics<parallel>], iteration_bounds = array<i64: 1>, scalar_prefetch = 0 : i64, scratch_operands = 0 : i64, tpu.core_type = #tpu.core_type<tc>, window_params = [{transform_indices = @transform_0, window_bounds = array<i64: 8, 32>}, {pipeline_mode = #tpu.pipeline_mode<synchronous>, transform_indices = @transform_1, window_bounds = array<i64: 32, 256>}, {pipeline_mode = #tpu.pipeline_mode<synchronous>, transform_indices = @transform_2, window_bounds = array<i64: 1, 256>}, {pipeline_mode = #tpu.pipeline_mode<synchronous>, transform_indices = @transform_3, window_bounds = array<i64: 256, 256>}, {transform_indices = @transform_4, window_bounds = array<i64: 8, 256>}]} {
    %c0 = arith.constant 0 : index
    %c0_0 = arith.constant 0 : index
    %0 = vector.load %arg1[%c0, %c0_0] : memref<8x32xbf16, #tpu.memory_space<vmem>>, vector<8x32xbf16>
    %c0_1 = arith.constant 0 : index
    %c0_2 = arith.constant 0 : index
    %1 = vector.load %arg2[%c0_1, %c0_2] : memref<32x256xbf16, #tpu.memory_space<vmem>>, vector<32x256xbf16>
    %cst = arith.constant dense<0.000000e+00> : vector<8x256xf32>
    %2 = tpu.matmul %0, %1, %cst {dimension_numbers = #tpu.dot_dimension_numbers<[1], [0], [0], [1], [0, 0, 1, 1], [], []>} : vector<8x32xbf16>, vector<32x256xbf16>, vector<8x256xf32> -> vector<8x256xf32>
    %c0_3 = arith.constant 0 : index
    %c0_4 = arith.constant 0 : index
    %3 = vector.load %arg3[%c0_3, %c0_4] : memref<1x256xf32, #tpu.memory_space<vmem>>, vector<1x256xf32>
    %4 = vector.broadcast %3 : vector<1x256xf32> to vector<8x256xf32>
    %5 = arith.addf %2, %4 : vector<8x256xf32>
    %6 = tpu.iota {dimensions = array<i32: 1>} : vector<1x256xi32>
    %c102_i32 = arith.constant 102 : i32
    %7 = vector.broadcast %c102_i32 : i32 to vector<1x256xi32>
    %8 = arith.cmpi sge, %6, %7 : vector<1x256xi32>
    %c174_i32 = arith.constant 174 : i32
    %9 = vector.broadcast %c174_i32 : i32 to vector<1x256xi32>
    %10 = arith.cmpi slt, %6, %9 : vector<1x256xi32>
    %11 = arith.andi %8, %10 : vector<1x256xi1>
    %c174_i32_5 = arith.constant 174 : i32
    %12 = vector.broadcast %c174_i32_5 : i32 to vector<1x256xi32>
    %13 = arith.cmpi sge, %6, %12 : vector<1x256xi32>
    %c194_i32 = arith.constant 194 : i32
    %14 = vector.broadcast %c194_i32 : i32 to vector<1x256xi32>
    %15 = arith.cmpi slt, %6, %14 : vector<1x256xi32>
    %16 = arith.andi %13, %15 : vector<1x256xi1>
    %cst_6 = arith.constant 0xFF800000 : f32
    %17 = vector.shape_cast %16 : vector<1x256xi1> to vector<1x256xi1>
    %18 = vector.broadcast %17 : vector<1x256xi1> to vector<8x256xi1>
    %19 = vector.broadcast %cst_6 : f32 to vector<8x256xf32>
    %20 = arith.select %18, %5, %19 : vector<8x256xi1>, vector<8x256xf32>
    %cst_7 = arith.constant dense<0xFF800000> : vector<8xf32>
    %21 = vector.multi_reduction <maximumf>, %20, %cst_7 [1] : vector<8x256xf32> to vector<8xf32>
    %22 = vector.shape_cast %21 : vector<8xf32> to vector<8x1xf32>
    %23 = vector.broadcast %22 : vector<8x1xf32> to vector<8x256xf32>
    %24 = arith.subf %5, %23 : vector<8x256xf32>
    %cst_8 = arith.constant -8.000000e+01 : f32
    %25 = vector.broadcast %cst_8 : f32 to vector<8x256xf32>
    %26 = arith.maximumf %24, %25 : vector<8x256xf32>
    %cst_9 = arith.constant 0.000000e+00 : f32
    %27 = vector.broadcast %cst_9 : f32 to vector<8x256xf32>
    %28 = arith.subf %27, %5 : vector<8x256xf32>
    %cst_10 = arith.constant 0.000000e+00 : f32
    %29 = vector.shape_cast %16 : vector<1x256xi1> to vector<1x256xi1>
    %30 = vector.broadcast %29 : vector<1x256xi1> to vector<8x256xi1>
    %31 = vector.broadcast %cst_10 : f32 to vector<8x256xf32>
    %32 = arith.select %30, %26, %31 : vector<8x256xi1>, vector<8x256xf32>
    %33 = vector.shape_cast %11 : vector<1x256xi1> to vector<1x256xi1>
    %34 = vector.broadcast %33 : vector<1x256xi1> to vector<8x256xi1>
    %35 = arith.select %34, %28, %32 : vector<8x256xi1>, vector<8x256xf32>
    %36 = math.exp %35 : vector<8x256xf32>
    %cst_11 = arith.constant 1.000000e+00 : f32
    %37 = vector.broadcast %cst_11 : f32 to vector<8x256xf32>
    %38 = arith.addf %37, %36 : vector<8x256xf32>
    %cst_12 = arith.constant 1.000000e+00 : f32
    %39 = vector.broadcast %cst_12 : f32 to vector<8x256xf32>
    %40 = arith.divf %39, %38 : vector<8x256xf32>
    %cst_13 = arith.constant 0.000000e+00 : f32
    %41 = vector.shape_cast %16 : vector<1x256xi1> to vector<1x256xi1>
    %42 = vector.broadcast %41 : vector<1x256xi1> to vector<8x256xi1>
    %43 = vector.broadcast %cst_13 : f32 to vector<8x256xf32>
    %44 = arith.select %42, %36, %43 : vector<8x256xi1>, vector<8x256xf32>
    %45 = arith.truncf %44 : vector<8x256xf32> to vector<8x256xbf16>
    %c0_14 = arith.constant 0 : index
    %c0_15 = arith.constant 0 : index
    %46 = vector.load %arg4[%c0_14, %c0_15] : memref<256x256xbf16, #tpu.memory_space<vmem>>, vector<256x256xbf16>
    %cst_16 = arith.constant dense<0.000000e+00> : vector<8x256xf32>
    %47 = tpu.matmul %45, %46, %cst_16 {dimension_numbers = #tpu.dot_dimension_numbers<[1], [0], [0], [1], [0, 0, 1, 1], [], []>} : vector<8x256xbf16>, vector<256x256xbf16>, vector<8x256xf32> -> vector<8x256xf32>
    %cst_17 = arith.constant 0.000000e+00 : f32
    %cst_18 = arith.constant 1.000000e+00 : f32
    %48 = vector.broadcast %cst_17 : f32 to vector<1x256xf32>
    %49 = vector.broadcast %cst_18 : f32 to vector<1x256xf32>
    %50 = arith.select %16, %48, %49 : vector<1x256xi1>, vector<1x256xf32>
    %51 = vector.broadcast %50 : vector<1x256xf32> to vector<8x256xf32>
    %52 = arith.addf %47, %51 : vector<8x256xf32>
    %53 = tpu.reciprocal %52 {approx = true} : vector<8x256xf32> -> vector<8x256xf32>
    %54 = arith.mulf %44, %53 : vector<8x256xf32>
    %55 = vector.shape_cast %11 : vector<1x256xi1> to vector<1x256xi1>
    %56 = vector.broadcast %55 : vector<1x256xi1> to vector<8x256xi1>
    %57 = arith.select %56, %40, %5 : vector<8x256xi1>, vector<8x256xf32>
    %58 = vector.shape_cast %16 : vector<1x256xi1> to vector<1x256xi1>
    %59 = vector.broadcast %58 : vector<1x256xi1> to vector<8x256xi1>
    %60 = arith.select %59, %54, %57 : vector<8x256xi1>, vector<8x256xf32>
    %c0_19 = arith.constant 0 : index
    %c0_20 = arith.constant 0 : index
    %61 = vector.load %arg5[%c0_19, %c0_20] : memref<8x256xf32, #tpu.memory_space<vmem>>, vector<8x256xf32>
    tpu.vector_store %arg5[%c0_19, %c0_20], %60 {strides = array<i32>} : memref<8x256xf32, #tpu.memory_space<vmem>>, vector<8x256xf32>,
    return
  }
  func.func @transform_0(%arg0: i32) -> (i32, i32) {
    %c0_i32 = arith.constant 0 : i32
    %c0_i32_0 = arith.constant 0 : i32
    return %arg0, %c0_i32 : i32, i32
  }
  func.func @transform_1(%arg0: i32) -> (i32, i32) {
    %c0_i32 = arith.constant 0 : i32
    %c0_i32_0 = arith.constant 0 : i32
    %c0_i32_1 = arith.constant 0 : i32
    return %c0_i32, %c0_i32_0 : i32, i32
  }
  func.func @transform_2(%arg0: i32) -> (i32, i32) {
    %c0_i32 = arith.constant 0 : i32
    %c0_i32_0 = arith.constant 0 : i32
    %c0_i32_1 = arith.constant 0 : i32
    return %c0_i32, %c0_i32_0 : i32, i32
  }
  func.func @transform_3(%arg0: i32) -> (i32, i32) {
    %c0_i32 = arith.constant 0 : i32
    %c0_i32_0 = arith.constant 0 : i32
    %c0_i32_1 = arith.constant 0 : i32
    return %c0_i32, %c0_i32_0 : i32, i32
  }
  func.func @transform_4(%arg0: i32) -> (i32, i32) {
    %c0_i32 = arith.constant 0 : i32
    %c0_i32_0 = arith.constant 0 : i32
    return %arg0, %c0_i32 : i32, i32
  }
}

</mosaic_0001>

<llo_original>
// kernel: _forward.1
$region0: #{_forward.1}
  #allocation0 [shape = 'u32[]', space=smem, size = 0x4, offset = 0x4, fixed_abs, tag = 'smem constant byte address 0x4 - core index']
  #allocation1 [shape = 'u32[144,128]{1,0:T(1,128)}', space=vmem, size = 0x12000, scoped, tag = 'internal scratch']
  %s0 = inlined_call_operand.vmem [shape: bf16[8,32], index: 0, kind: input, shape index: {}]
  %s1 = inlined_call_operand.hbm [shape: bf16[32,256], index: 1, kind: input, shape index: {}]
  %s2 = inlined_call_operand.vmem [shape: f32[1,256], index: 2, kind: input, shape index: {}]
  %s3 = inlined_call_operand.hbm [shape: bf16[256,256], index: 3, kind: input, shape index: {}]
  %s4 = inlined_call_operand.vmem [shape: f32[8,256], index: 4, kind: output, shape index: {}]
  %s5 = sld [smem:[#allocation0]]
  $region34: #{_forward.1} parent=0
    _
  %s7 = ssub.s32 1, %s5
  %s8 = scalar_select 0, %s7, %s5
  $region1: #{_forward.1} parent=0
    #allocation2 [shape = 'u8[16384]{0}', space=vmem, size = 0x4000, scoped, tag = 'input window, operand 1, single buffered']
    #allocation3 [shape = 's32[1]{0}', space=sflag, size = 0x4, scoped, tag = 'scoped memory for _forward.1']
    #allocation4 [shape = 'u8[131072]{0}', space=vmem, size = 0x20000, scoped, tag = 'input window, operand 3, single buffered']
    #allocation5 [shape = 's32[1]{0}', space=sflag, size = 0x4, scoped, tag = 'scoped memory for _forward.1']
    %9 = vsyncpa [#allocation3], 0
    %10 = vsyncpa [#allocation5], 0
    // Predicated region
    $region2: #{_forward.1} parent=1 // pred_check
      _
    $region3: #{_forward.1} parent=1 // pred_check_branch
      %12 = sbr.rel (0) target = $region5
    $region4: #{_forward.1} parent=1 // pred_region
      _
    $region5: #{_forward.1} parent=1 // pred_fallthru
      _
    // Predicated region
    $region6: #{_forward.1} parent=1 // pred_check
      _
    $region7: #{_forward.1} parent=1 // pred_check_branch
      %14 = sbr.rel (0) target = $region9
    $region8: #{_forward.1} parent=1 // pred_region
      %s16 = ssub.s32 512, 512
      %17 = vsyncadd [#allocation3], %s16
      %s18 = sshll.u32 [#allocation2], 4
      %s19 = int_to_ptr.vmem [resolvable:$true] %s18
      %24 = dma.hbm_to_vmem [thread:$0]  %s1, 512, %s19, [#allocation3], 128, 128, 8
    $region9: #{_forward.1} parent=1 // pred_fallthru
      _
    // Predicated region
    $region10: #{_forward.1} parent=1 // pred_check
      _
    $region11: #{_forward.1} parent=1 // pred_check_branch
      %26 = sbr.rel (0) target = $region13
    $region12: #{_forward.1} parent=1 // pred_region
      _
    $region13: #{_forward.1} parent=1 // pred_fallthru
      _
    // Predicated region
    $region14: #{_forward.1} parent=1 // pred_check
      _
    $region15: #{_forward.1} parent=1 // pred_check_branch
      %28 = sbr.rel (0) target = $region17
    $region16: #{_forward.1} parent=1 // pred_region
      %s30 = ssub.s32 4096, 4096
      %31 = vsyncadd [#allocation5], %s30
      %s32 = sshll.u32 [#allocation4], 4
      %s33 = int_to_ptr.vmem [resolvable:$true] %s32
      %38 = dma.hbm_to_vmem [thread:$0]  %s3, 4096, %s33, [#allocation5], 128, 128, 8
    $region17: #{_forward.1} parent=1 // pred_fallthru
      _
    // Predicated region
    $region18: #{_forward.1} parent=1 // pred_check
      _
    $region19: #{_forward.1} parent=1 // pred_check_branch
      %40 = sbr.rel (0) target = $region21
    $region20: #{_forward.1} parent=1 // pred_region
      %41 = dma.done [#allocation3], 512
    $region21: #{_forward.1} parent=1 // pred_fallthru
      _
    // Predicated region
    $region22: #{_forward.1} parent=1 // pred_check
      _
    $region23: #{_forward.1} parent=1 // pred_check_branch
      %43 = sbr.rel (0) target = $region25
    $region24: #{_forward.1} parent=1 // pred_region
      %44 = dma.done [#allocation5], 4096
    $region25: #{_forward.1} parent=1 // pred_fallthru
      _
    %v46 = vld [vmem:[%s0] sm:$0xf]
    %v47 = vld [vmem:[#allocation2] sm:$0xff]
    %v48 = vld [vmem:[#allocation2 + $0x8] sm:$0xff]
    %v49 = vld [vmem:[#allocation2 + $0x10] sm:$0xff]
    %v50 = vld [vmem:[#allocation2 + $0x18] sm:$0xff]
    %v51 = vld [vmem:[%s2] sm:$0x3]
    %v53 = vlaneseq
    %v54 = vshrl.u32 %v53, 7
    %v55 = vsub.s32 0, %v54
    %v56 = vrot.slane %v51, %v55
    %v57 = vlaneseq
    %v58 = vshrl.u32 %v57, 7
    %v59 = vsub.s32 1, %v58
    %v60 = vrot.slane %v51, %v59
    %v67 = vunpack.c.l.b16 %v47
    %v68 = vunpack.c.h.b16 %v47
    %v69 = vunpack.c.l.b16 %v48
    %v70 = vunpack.c.h.b16 %v48
    %v71 = vunpack.c.l.b16 %v49
    %v72 = vunpack.c.h.b16 %v49
    %v73 = vunpack.c.l.b16 %v50
    %v74 = vunpack.c.h.b16 %v50
    %v75 = vpack.c.b16 %v69, %v67
    %v76 = vpack.c.b16 %v70, %v68
    %v77 = vpack.c.b16 %v73, %v71
    %v78 = vpack.c.b16 %v74, %v72
    %vm83 = vcmask 261120
    %v85 = vsel %vm83, %v46, 0
    %87 = vmatprep.subr.bf16.mxu0 0
    %88 = vmatpush1.bf16.msra.mxu0 0
    %89 = vmatprep.subr.bf16.mxu0 0
    %90 = vmatpush1.bf16.msra.mxu0 0
    %91 = vmatprep.subr.bf16.mxu0 0
    %92 = vmatpush1.bf16.msra.mxu0 0
    %93 = vmatprep.subr.bf16.mxu0 0
    %94 = vmatpush1.bf16.msra.mxu0 0
    %95 = vmatprep.subr.bf16.mxu0 0
    %96 = vmatpush1.bf16.msra.mxu0 0
    %97 = vmatprep.subr.bf16.mxu0 0
    %98 = vmatpush1.bf16.msra.mxu0 0
    %99 = vmatprep.subr.bf16.mxu0 %v78
    %100 = vmatpush1.bf16.msra.mxu0 %v77
    %101 = vmatprep.subr.bf16.mxu0 %v76
    %102 = vmatpush1.bf16.msra.mxu0 %v75
    %103 = vmatprep.subr.bf16.mxu0 0
    %104 = vmatpush2.bf16.msra.mxu0 0
    %105 = vmatprep.subr.bf16.mxu0 0
    %106 = vmatpush2.bf16.msra.mxu0 0
    %107 = vmatprep.subr.bf16.mxu0 0
    %108 = vmatpush2.bf16.msra.mxu0 0
    %109 = vmatprep.subr.bf16.mxu0 0
    %110 = vmatpush2.bf16.msra.mxu0 0
    %111 = vmatprep.subr.bf16.mxu0 0
    %112 = vmatpush2.bf16.msra.mxu0 0
    %113 = vmatprep.subr.bf16.mxu0 0
    %114 = vmatpush2.bf16.msra.mxu0 0
    %115 = vmatprep.subr.bf16.mxu0 0
    %116 = vmatpush2.bf16.msra.mxu0 0
    %117 = vmatprep.subr.bf16.mxu0 0
    %118 = vmatpush2.bf16.msra.mxu0 0
    %119 = vmatprep.mubr.bf16.mxu0 0
    %120 = vmatmul.mubr.bf16.gmra.mxu0 %v85
    %v121 = vpop.f32.mrf.mxu0
    %v122 = vadd.f32 %v56, %v121
    %v123 = vpop.f32.mrf.mxu0
    %v124 = vadd.f32 %v60, %v123
    %v125 = vpop.f32.mrf.mxu0
    %v126 = vpop.f32.mrf.mxu0
    %127 = vdwg.mxu0
    %v128 = vlaneseq
    %v129 = vand.u32 %v128, 127
    %v130 = vadd.s32 %v129, 128
    %vm131 = vcmp.ge.s32.totalorder %v129, 102
    %vm132 = vcmp.ge.s32.totalorder %v130, 102
    %vm133 = vcmp.lt.s32.totalorder %v129, 174
    %vm134 = vcmp.lt.s32.totalorder %v130, 174
    %vm135 = vmand %vm131, %vm133
    %vm136 = vmand %vm132, %vm134
    %vm137 = vcmp.ge.s32.totalorder %v129, 174
    %vm138 = vcmp.ge.s32.totalorder %v130, 174
    %vm139 = vcmp.lt.s32.totalorder %v129, 194
    %vm140 = vcmp.lt.s32.totalorder %v130, 194
    %vm141 = vmand %vm137, %vm139
    %vm142 = vmand %vm138, %vm140
    %v143 = vsel %vm141, 1, 0
    %v144 = vsel %vm142, 1, 0
    %vm145 = vcmp.eq.s32.totalorder %v143, 1
    %vm146 = vcmp.eq.s32.totalorder %v144, 1
    %v147 = vsel %vm145, %v122, -inf
    %v148 = vsel %vm146, %v124, -inf
    %v149 = vmax.f32 %v147, %v148
    %150 = vmax.xlane.f32.xlu0 %v149
    %v151 = vpop.xlane.xlu0 %150
    %v152 = vsub.f32 %v122, %v151
    %v153 = vsub.f32 %v124, %v151
    %v154 = vmax.f32 %v152, -80.0
    %v155 = vmax.f32 %v153, -80.0
    %v156 = vsub.f32 0.0, %v122
    %v157 = vsub.f32 0.0, %v124
    %v158 = vsel %vm145, %v154, 0.0
    %v159 = vsel %vm146, %v155, 0.0
    %v160 = vsel %vm135, 1, 0
    %v161 = vsel %vm136, 1, 0
    %vm162 = vcmp.eq.s32.totalorder %v160, 1
    %vm163 = vcmp.eq.s32.totalorder %v161, 1
    %v164 = vsel %vm162, %v156, %v158
    %v165 = vsel %vm163, %v157, %v159
    %v166 = vmul.f32 %v164, 1.442695
    %v167 = vpow.pop %v166
    %v168 = vmul.f32 %v165, 1.442695
    %v169 = vpow.pop %v168
    %v170 = vadd.f32 %v167, 1.0
    %v171 = vadd.f32 %v169, 1.0
    %v172 = vrcp.pop %v170
    %v173 = vmul.f32 1.0, %v172
    %v174 = vrcp.pop %v171
    %v175 = vmul.f32 1.0, %v174
    %v176 = vsel %vm145, %v167, 0.0
    %v177 = vsel %vm146, %v169, 0.0
    %v178 = vpack.c.bf16 %v176, %v176
    %v179 = vpack.c.bf16 %v177, %v177
    %v180 = vld [vmem:[#allocation4] sm:$0xff]
    %v181 = vld [vmem:[#allocation4 + $0x8] sm:$0xff]
    %v182 = vld [vmem:[#allocation4 + $0x10] sm:$0xff]
    %v183 = vld [vmem:[#allocation4 + $0x18] sm:$0xff]
    %v184 = vld [vmem:[#allocation4 + $0x20] sm:$0xff]
    %v185 = vld [vmem:[#allocation4 + $0x28] sm:$0xff]
    %v186 = vld [vmem:[#allocation4 + $0x30] sm:$0xff]
    %v187 = vld [vmem:[#allocation4 + $0x38] sm:$0xff]
    %v188 = vld [vmem:[#allocation4 + $0x40] sm:$0xff]
    %v189 = vld [vmem:[#allocation4 + $0x48] sm:$0xff]
    %v190 = vld [vmem:[#allocation4 + $0x50] sm:$0xff]
    %v191 = vld [vmem:[#allocation4 + $0x58] sm:$0xff]
    %v192 = vld [vmem:[#allocation4 + $0x60] sm:$0xff]
    %v193 = vld [vmem:[#allocation4 + $0x68] sm:$0xff]
    %v194 = vld [vmem:[#allocation4 + $0x70] sm:$0xff]
    %v195 = vld [vmem:[#allocation4 + $0x78] sm:$0xff]
    %v196 = vld [vmem:[#allocation4 + $0x80] sm:$0xff]
    %v197 = vld [vmem:[#allocation4 + $0x88] sm:$0xff]
    %v198 = vld [vmem:[#allocation4 + $0x90] sm:$0xff]
    %v199 = vld [vmem:[#allocation4 + $0x98] sm:$0xff]
    %v200 = vld [vmem:[#allocation4 + $0xa0] sm:$0xff]
    %v201 = vld [vmem:[#allocation4 + $0xa8] sm:$0xff]
    %v202 = vld [vmem:[#allocation4 + $0xb0] sm:$0xff]
    %v203 = vld [vmem:[#allocation4 + $0xb8] sm:$0xff]
    %v204 = vld [vmem:[#allocation4 + $0xc0] sm:$0xff]
    %v205 = vld [vmem:[#allocation4 + $0xc8] sm:$0xff]
    %v206 = vld [vmem:[#allocation4 + $0xd0] sm:$0xff]
    %v207 = vld [vmem:[#allocation4 + $0xd8] sm:$0xff]
    %v208 = vld [vmem:[#allocation4 + $0xe0] sm:$0xff]
    %v209 = vld [vmem:[#allocation4 + $0xe8] sm:$0xff]
    %v210 = vld [vmem:[#allocation4 + $0xf0] sm:$0xff]
    %v211 = vld [vmem:[#allocation4 + $0xf8] sm:$0xff]
    %v212 = vsel %vm141, 0.0, 1.0
    %v213 = vsel %vm142, 0.0, 1.0
    %v246 = vunpack.c.l.b16 %v180
    %v247 = vunpack.c.h.b16 %v180
    %v248 = vunpack.c.l.b16 %v181
    %v249 = vunpack.c.h.b16 %v181
    %v250 = vunpack.c.l.b16 %v182
    %v251 = vunpack.c.h.b16 %v182
    %v252 = vunpack.c.l.b16 %v183
    %v253 = vunpack.c.h.b16 %v183
    %v254 = vunpack.c.l.b16 %v184
    %v255 = vunpack.c.h.b16 %v184
    %v256 = vunpack.c.l.b16 %v185
    %v257 = vunpack.c.h.b16 %v185
    %v258 = vunpack.c.l.b16 %v186
    %v259 = vunpack.c.h.b16 %v186
    %v260 = vunpack.c.l.b16 %v187
    %v261 = vunpack.c.h.b16 %v187
    %v262 = vunpack.c.l.b16 %v188
    %v263 = vunpack.c.h.b16 %v188
    %v264 = vunpack.c.l.b16 %v189
    %v265 = vunpack.c.h.b16 %v189
    %v266 = vunpack.c.l.b16 %v190
    %v267 = vunpack.c.h.b16 %v190
    %v268 = vunpack.c.l.b16 %v191
    %v269 = vunpack.c.h.b16 %v191
    %v270 = vunpack.c.l.b16 %v192
    %v271 = vunpack.c.h.b16 %v192
    %v272 = vunpack.c.l.b16 %v193
    %v273 = vunpack.c.h.b16 %v193
    %v274 = vunpack.c.l.b16 %v194
    %v275 = vunpack.c.h.b16 %v194
    %v276 = vunpack.c.l.b16 %v195
    %v277 = vunpack.c.h.b16 %v195
    %v278 = vunpack.c.l.b16 %v196
    %v279 = vunpack.c.h.b16 %v196
    %v280 = vunpack.c.l.b16 %v197
    %v281 = vunpack.c.h.b16 %v197
    %v282 = vunpack.c.l.b16 %v198
    %v283 = vunpack.c.h.b16 %v198
    %v284 = vunpack.c.l.b16 %v199
    %v285 = vunpack.c.h.b16 %v199
    %v286 = vunpack.c.l.b16 %v200
    %v287 = vunpack.c.h.b16 %v200
    %v288 = vunpack.c.l.b16 %v201
    %v289 = vunpack.c.h.b16 %v201
    %v290 = vunpack.c.l.b16 %v202
    %v291 = vunpack.c.h.b16 %v202
    %v292 = vunpack.c.l.b16 %v203
    %v293 = vunpack.c.h.b16 %v203
    %v294 = vunpack.c.l.b16 %v204
    %v295 = vunpack.c.h.b16 %v204
    %v296 = vunpack.c.l.b16 %v205
    %v297 = vunpack.c.h.b16 %v205
    %v298 = vunpack.c.l.b16 %v206
    %v299 = vunpack.c.h.b16 %v206
    %v300 = vunpack.c.l.b16 %v207
    %v301 = vunpack.c.h.b16 %v207
    %v302 = vunpack.c.l.b16 %v208
    %v303 = vunpack.c.h.b16 %v208
    %v304 = vunpack.c.l.b16 %v209
    %v305 = vunpack.c.h.b16 %v209
    %v306 = vunpack.c.l.b16 %v210
    %v307 = vunpack.c.h.b16 %v210
    %v308 = vunpack.c.l.b16 %v211
    %v309 = vunpack.c.h.b16 %v211
    %v310 = vpack.c.b16 %v248, %v246
    %v311 = vpack.c.b16 %v249, %v247
    %v312 = vpack.c.b16 %v252, %v250
    %v313 = vpack.c.b16 %v253, %v251
    %v314 = vpack.c.b16 %v256, %v254
    %v315 = vpack.c.b16 %v257, %v255
    %v316 = vpack.c.b16 %v260, %v258
    %v317 = vpack.c.b16 %v261, %v259
    %v318 = vpack.c.b16 %v264, %v262
    %v319 = vpack.c.b16 %v265, %v263
    %v320 = vpack.c.b16 %v268, %v266
    %v321 = vpack.c.b16 %v269, %v267
    %v322 = vpack.c.b16 %v272, %v270
    %v323 = vpack.c.b16 %v273, %v271
    %v324 = vpack.c.b16 %v276, %v274
    %v325 = vpack.c.b16 %v277, %v275
    %v326 = vpack.c.b16 %v280, %v278
    %v327 = vpack.c.b16 %v281, %v279
    %v328 = vpack.c.b16 %v284, %v282
    %v329 = vpack.c.b16 %v285, %v283
    %v330 = vpack.c.b16 %v288, %v286
    %v331 = vpack.c.b16 %v289, %v287
    %v332 = vpack.c.b16 %v292, %v290
    %v333 = vpack.c.b16 %v293, %v291
    %v334 = vpack.c.b16 %v296, %v294
    %v335 = vpack.c.b16 %v297, %v295
    %v336 = vpack.c.b16 %v300, %v298
    %v337 = vpack.c.b16 %v301, %v299
    %v338 = vpack.c.b16 %v304, %v302
    %v339 = vpack.c.b16 %v305, %v303
    %v340 = vpack.c.b16 %v308, %v306
    %v341 = vpack.c.b16 %v309, %v307
    %374 = vmatprep.subr.bf16.mxu0 %v325
    %375 = vmatpush1.bf16.msra.mxu0 %v324
    %376 = vmatprep.subr.bf16.mxu0 %v323
    %377 = vmatpush1.bf16.msra.mxu0 %v322
    %378 = vmatprep.subr.bf16.mxu0 %v321
    %379 = vmatpush1.bf16.msra.mxu0 %v320
    %380 = vmatprep.subr.bf16.mxu0 %v319
    %381 = vmatpush1.bf16.msra.mxu0 %v318
    %382 = vmatprep.subr.bf16.mxu0 %v317
    %383 = vmatpush1.bf16.msra.mxu0 %v316
    %384 = vmatprep.subr.bf16.mxu0 %v315
    %385 = vmatpush1.bf16.msra.mxu0 %v314
    %386 = vmatprep.subr.bf16.mxu0 %v313
    %387 = vmatpush1.bf16.msra.mxu0 %v312
    %388 = vmatprep.subr.bf16.mxu0 %v311
    %389 = vmatpush1.bf16.msra.mxu0 %v310
    %390 = vmatprep.subr.bf16.mxu0 %v341
    %391 = vmatpush2.bf16.msra.mxu0 %v340
    %392 = vmatprep.subr.bf16.mxu0 %v339
    %393 = vmatpush2.bf16.msra.mxu0 %v338
    %394 = vmatprep.subr.bf16.mxu0 %v337
    %395 = vmatpush2.bf16.msra.mxu0 %v336
    %396 = vmatprep.subr.bf16.mxu0 %v335
    %397 = vmatpush2.bf16.msra.mxu0 %v334
    %398 = vmatprep.subr.bf16.mxu0 %v333
    %399 = vmatpush2.bf16.msra.mxu0 %v332
    %400 = vmatprep.subr.bf16.mxu0 %v331
    %401 = vmatpush2.bf16.msra.mxu0 %v330
    %402 = vmatprep.subr.bf16.mxu0 %v329
    %403 = vmatpush2.bf16.msra.mxu0 %v328
    %404 = vmatprep.subr.bf16.mxu0 %v327
    %405 = vmatpush2.bf16.msra.mxu0 %v326
    %406 = vmatprep.mubr.bf16.mxu0 %v179
    %407 = vmatmul.mubr.bf16.gmra.mxu0 %v178
    %v408 = vpop.f32.mrf.mxu0
    %v409 = vadd.f32 %v212, %v408
    %v410 = vpop.f32.mrf.mxu0
    %v411 = vadd.f32 %v213, %v410
    %v412 = vpop.f32.mrf.mxu0
    %v413 = vpop.f32.mrf.mxu0
    %414 = vdwg.mxu0
    %v415 = vrcp.pop %v409
    %v416 = vrcp.pop %v411
    %v417 = vmul.f32 %v176, %v415
    %v418 = vmul.f32 %v177, %v416
    %v419 = vsel %vm162, %v173, %v122
    %v420 = vsel %vm163, %v175, %v124
    %v421 = vsel %vm145, %v417, %v419
    %v422 = vsel %vm146, %v418, %v420
    %423 = vst [vmem:[%s4] sm:$0xff] %v421
    %424 = vst [vmem:[%s4 + $0x8] sm:$0xff] %v422
    // Predicated region
    $region26: #{_forward.1} parent=1 // pred_check
      _
    $region27: #{_forward.1} parent=1 // pred_check_branch
      %426 = sbr.rel (0) target = $region29
    $region28: #{_forward.1} parent=1 // pred_region
      _
    $region29: #{_forward.1} parent=1 // pred_fallthru
      _
    // Predicated region
    $region30: #{_forward.1} parent=1 // pred_check
      _
    $region31: #{_forward.1} parent=1 // pred_check_branch
      %428 = sbr.rel (0) target = $region33
    $region32: #{_forward.1} parent=1 // pred_region
      _
    $region33: #{_forward.1} parent=1 // pred_fallthru
      _
    %429 = vsyncpa [#allocation3], 1
    %430 = vsyncpa [#allocation5], 1

</llo_original>
